<compile_context>
chip_gen: v7x
topology: tpu7x:2x2x1
jax: 0.10.0
libtpu: 0.0.40
codegen_flags: <defaults>
</compile_context>

<pallas_src>
import functools

import jax
import jax.numpy as jnp
from jax.experimental import pallas as pl
from jax.experimental.pallas import tpu as pltpu


def _round_up(x: int, m: int) -> int:
    return ((x + m - 1) // m) * m


_TM_CAP = 512    # rows of x per tile (bigger tm => fewer full passes over W)
_TN_CAP = 512    # output features per tile
_TK_CAP = 2048   # reduction (input features) per tile


def _plan_k(D: int):
    """(tk, D_pad): full-extent K block when it fits, else 128-aligned tiles."""
    if D <= _TK_CAP:
        return D, D
    D_pad = _round_up(D, 128)
    for c in (2048, 1024, 512, 256, 128):
        if D_pad % c == 0:
            return c, D_pad
    raise AssertionError("unreachable: D_pad is a multiple of 128")


def _plan_n(O: int):
    """(tn, O_pad): full-extent N block when small, else 128-aligned tiles."""
    if O <= _TN_CAP:
        return O, O
    O_pad = _round_up(O, 128)
    for c in (512, 256, 128):
        if O_pad % c == 0:
            return c, O_pad
    raise AssertionError("unreachable: O_pad is a multiple of 128")


def _plan_m(B: int, n_blocks_n: int):
    """(tm, B_pad): give megacore >=2 parallel blocks when B is large enough."""
    if B <= _TM_CAP and (n_blocks_n >= 2 or B < 16):
        return B, B                      # single full-extent block, no padding
    blocks = max(2 if n_blocks_n < 2 else 1, -(-B // _TM_CAP))
    tm = min(_TM_CAP, _round_up(-(-B // blocks), 8))
    return tm, _round_up(B, tm)


def prepare_params(weight, bias):
    """One-time parameter prep (outside the hot path): bf16 cast + optional pad.

    weight: (O, D)  -- PyTorch nn.Linear layout, kept as-is (never transposed).
    bias:   (O,)
    """
    O, D = weight.shape
    tk, D_pad = _plan_k(D)
    tn, O_pad = _plan_n(O)

    w = weight.astype(jnp.bfloat16)
    if (O_pad, D_pad) != (O, D):
        w = jnp.pad(w, ((0, O_pad - O), (0, D_pad - D)))

    b = bias.astype(jnp.float32).reshape(1, O)
    if O_pad != O:
        b = jnp.pad(b, ((0, 0), (0, O_pad - O)))

    meta = dict(O=O, D=D, tk=tk, D_pad=D_pad, tn=tn, O_pad=O_pad)
    return w, b, meta


def _linear_kernel(x_ref, w_ref, b_ref, o_ref, *, tn: int, n_blocks_n: int):
    # x_ref: (tm, tk) bf16; w_ref: (tn, tk) bf16 ((O, D) layout);
    # b_ref: (1, O_pad) f32, VMEM-resident; o_ref: (tm, tn) f32 -- the same
    # output block is revisited across the K grid axis and used as accumulator.
    k = pl.program_id(2)

    # Contract on the last dims of both operands -> (tm, tn); no transpose.
    part = jax.lax.dot_general(
        x_ref[...], w_ref[...],
        dimension_numbers=(((1,), (1,)), ((), ())),
        preferred_element_type=jnp.float32,
    )

    @pl.when(k == 0)
    def _():
        if n_blocks_n == 1:            # static branch: common classifier-head case
            bias = b_ref[...]
        else:
            # tn is a multiple of 128 whenever N is split -> aligned lane slice.
            col = pl.multiple_of(pl.program_id(1) * tn, tn)
            bias = b_ref[:, pl.ds(col, tn)]
        o_ref[...] = part + bias

    @pl.when(k != 0)
    def _():
        o_ref[...] += part


def linear_forward(x, w_prep, b_prep, meta):
    """Hot path: y = x @ W.T + b with prepared (bf16) parameters."""
    D, O = meta["D"], meta["O"]
    tk, D_pad = meta["tk"], meta["D_pad"]
    tn, O_pad = meta["tn"], meta["O_pad"]
    B, Dx = x.shape
    assert Dx == D, "input feature dim must match weight"

    n_blocks_n = O_pad // tn
    tm, B_pad = _plan_m(B, n_blocks_n)

    x_in = x.astype(jnp.bfloat16)
    if (B_pad, D_pad) != (B, D):
        x_in = jnp.pad(x_in, ((0, B_pad - B), (0, D_pad - D)))

    grid = (B_pad // tm, O_pad // tn, D_pad // tk)   # reduction (K) last

    # Explicit VMEM budget: double-buffered x/W tiles (bf16), double-buffered
    # f32 output tile, resident bias.  Max ~10 MiB with the caps above, so it
    # fits every generation (v5e 16-MiB scoped default, v7x 64-MiB physical).
    vmem_bytes = (2 * tm * tk * 2) + (2 * tn * tk * 2) + (2 * tm * tn * 4) + O_pad * 4
    vmem_limit = int(min(48 * 2**20, max(16 * 2**20, 2 * vmem_bytes)))

    cost = pl.CostEstimate(
        flops=2 * B * D * O,
        bytes_accessed=2 * B * D + 2 * O * D + 4 * B * O + 4 * O,
        transcendentals=0,
    )

    kernel = functools.partial(_linear_kernel, tn=tn, n_blocks_n=n_blocks_n)

    out = pl.pallas_call(
        kernel,
        out_shape=jax.ShapeDtypeStruct((B_pad, O_pad), jnp.float32),
        grid_spec=pltpu.PrefetchScalarGridSpec(
            num_scalar_prefetch=0,
            grid=grid,
            in_specs=[
                pl.BlockSpec((tm, tk), lambda i, j, k: (i, k)),       # x tile
                pl.BlockSpec((tn, tk), lambda i, j, k: (j, k)),       # W tile (O, D)
                pl.BlockSpec(memory_space=pltpu.MemorySpace.VMEM),    # bias resident
            ],
            out_specs=pl.BlockSpec((tm, tn), lambda i, j, k: (i, j)),
        ),
        compiler_params=pltpu.CompilerParams(
            dimension_semantics=("parallel", "parallel", "arbitrary"),
            vmem_limit_bytes=vmem_limit,
        ),
        cost_estimate=cost,
    )(x_in, w_prep, b_prep)

    if (B_pad, O_pad) != (B, O):
        out = out[:B, :O]
    if out.dtype != x.dtype:
        out = out.astype(x.dtype)
    return out


def linear_classifier_forward(x, weight, bias):
    """Convenience wrapper matching nn.Linear: x @ weight.T + bias."""
    w_prep, b_prep, meta = prepare_params(weight, bias)
    return linear_forward(x, w_prep, b_prep, meta)


if __name__ == "__main__":
    # Small shapes consistent with a linear classifier head.
    batch = 8
    input_dim = 32
    output_dim = 8

    key = jax.random.PRNGKey(0)
    kx, kw, kb = jax.random.split(key, 3)

    x = jax.random.normal(kx, (batch, input_dim), dtype=jnp.float32)

    # Deterministic init mimicking nn.Linear's uniform(-1/sqrt(D), 1/sqrt(D)).
    bound = 1.0 / (input_dim ** 0.5)
    weight = jax.random.uniform(
        kw, (output_dim, input_dim), dtype=jnp.float32, minval=-bound, maxval=bound
    )
    bias = jax.random.uniform(
        kb, (output_dim,), dtype=jnp.float32, minval=-bound, maxval=bound
    )

    # One-time parameter prep (outside the hot path), then the kernel.
    w_prep, b_prep, meta = prepare_params(weight, bias)
    out = linear_forward(x, w_prep, b_prep, meta)
    out = jax.block_until_ready(out)

    assert out.shape == (batch, output_dim)

    # Apples-to-apples reference with the same bf16-input / f32-acc numerics.
    x_bf = x.astype(jnp.bfloat16).astype(jnp.float32)
    w_bf = weight.astype(jnp.bfloat16).astype(jnp.float32)
    ref_bf16 = x_bf @ w_bf.T + bias
    assert jnp.allclose(out, ref_bf16, atol=2e-3, rtol=2e-3)

    # Loose sanity check against the exact f32 nn.Linear (bf16 input rounding).
    ref_f32 = x @ weight.T + bias
    assert jnp.allclose(out, ref_f32, atol=1e-1, rtol=1e-1)

    print("KERNEL_OK")
</pallas_src>

<mosaic_0001>
module attributes {stable_mosaic.version = 11 : i64} {
  func.func @_linear_kernel(%arg0: i32, %arg1: i32, %arg2: i32, %arg3: memref<8x32xbf16, #tpu.memory_space<vmem>>, %arg4: memref<8x32xbf16, #tpu.memory_space<vmem>>, %arg5: memref<1x8xf32, #tpu.memory_space<vmem>>, %arg6: memref<8x8xf32, #tpu.memory_space<vmem>>) attributes {dimension_semantics = [#tpu.dimension_semantics<parallel>, #tpu.dimension_semantics<parallel>, #tpu.dimension_semantics<arbitrary>], iteration_bounds = array<i64: 1, 1, 1>, scalar_prefetch = 0 : i64, scratch_operands = 0 : i64, tpu.core_type = #tpu.core_type<tc>, window_params = [{transform_indices = @transform_0, window_bounds = array<i64: 8, 32>}, {transform_indices = @transform_1, window_bounds = array<i64: 8, 32>}, {pipeline_mode = #tpu.pipeline_mode<synchronous>, transform_indices = @transform_2, window_bounds = array<i64: 1, 8>}, {transform_indices = @transform_3, window_bounds = array<i64: 8, 8>}]} {
    %c0 = arith.constant 0 : index
    %c0_0 = arith.constant 0 : index
    %0 = vector.load %arg3[%c0, %c0_0] : memref<8x32xbf16, #tpu.memory_space<vmem>>, vector<8x32xbf16>
    %c0_1 = arith.constant 0 : index
    %c0_2 = arith.constant 0 : index
    %1 = vector.load %arg4[%c0_1, %c0_2] : memref<8x32xbf16, #tpu.memory_space<vmem>>, vector<8x32xbf16>
    %cst = arith.constant dense<0.000000e+00> : vector<8x8xf32>
    %2 = tpu.matmul %0, %1, %cst {dimension_numbers = #tpu.dot_dimension_numbers<[1], [1], [0], [0], [0, 0, 1, 0], [], []>} : vector<8x32xbf16>, vector<8x32xbf16>, vector<8x8xf32> -> vector<8x8xf32>
    %c0_i32 = arith.constant 0 : i32
    %3 = arith.cmpi eq, %arg2, %c0_i32 : i32
    %4 = arith.extui %3 : i1 to i32
    %c0_i32_3 = arith.constant 0 : i32
    %5 = arith.cmpi ne, %4, %c0_i32_3 : i32
    scf.if %5 {
      %c0_6 = arith.constant 0 : index
      %c0_7 = arith.constant 0 : index
      %9 = vector.load %arg5[%c0_6, %c0_7] : memref<1x8xf32, #tpu.memory_space<vmem>>, vector<1x8xf32>
      %10 = vector.broadcast %9 : vector<1x8xf32> to vector<8x8xf32>
      %11 = arith.addf %2, %10 : vector<8x8xf32>
      %c0_8 = arith.constant 0 : index
      %c0_9 = arith.constant 0 : index
      %12 = vector.load %arg6[%c0_8, %c0_9] : memref<8x8xf32, #tpu.memory_space<vmem>>, vector<8x8xf32>
      tpu.vector_store %arg6[%c0_8, %c0_9], %11 {strides = array<i32>} : memref<8x8xf32, #tpu.memory_space<vmem>>, vector<8x8xf32>,
    } else {
    }
    %c0_i32_4 = arith.constant 0 : i32
    %6 = arith.cmpi ne, %arg2, %c0_i32_4 : i32
    %7 = arith.extui %6 : i1 to i32
    %c0_i32_5 = arith.constant 0 : i32
    %8 = arith.cmpi ne, %7, %c0_i32_5 : i32
    scf.if %8 {
      %c0_6 = arith.constant 0 : index
      %c0_7 = arith.constant 0 : index
      %9 = vector.load %arg6[%c0_6, %c0_7] : memref<8x8xf32, #tpu.memory_space<vmem>>, vector<8x8xf32>
      %10 = arith.addf %9, %2 : vector<8x8xf32>
      %c0_8 = arith.constant 0 : index
      %c0_9 = arith.constant 0 : index
      %11 = vector.load %arg6[%c0_8, %c0_9] : memref<8x8xf32, #tpu.memory_space<vmem>>, vector<8x8xf32>
      tpu.vector_store %arg6[%c0_8, %c0_9], %10 {strides = array<i32>} : memref<8x8xf32, #tpu.memory_space<vmem>>, vector<8x8xf32>,
    } else {
    }
    return
  }
  func.func @transform_0(%arg0: i32, %arg1: i32, %arg2: i32) -> (i32, i32) {
    %c0_i32 = arith.constant 0 : i32
    return %arg0, %arg2 : i32, i32
  }
  func.func @transform_1(%arg0: i32, %arg1: i32, %arg2: i32) -> (i32, i32) {
    %c0_i32 = arith.constant 0 : i32
    return %arg1, %arg2 : i32, i32
  }
  func.func @transform_2(%arg0: i32, %arg1: i32, %arg2: i32) -> (i32, i32) {
    %c0_i32 = arith.constant 0 : i32
    %c0_i32_0 = arith.constant 0 : i32
    %c0_i32_1 = arith.constant 0 : i32
    return %c0_i32, %c0_i32_0 : i32, i32
  }
  func.func @transform_3(%arg0: i32, %arg1: i32, %arg2: i32) -> (i32, i32) {
    %c0_i32 = arith.constant 0 : i32
    return %arg0, %arg1 : i32, i32
  }
}

</mosaic_0001>

<llo_original>
// kernel: tpu_custom_call.1
$region0: #{tpu_custom_call.1}
  #allocation0 [shape = 'u32[]', space=smem, size = 0x4, offset = 0x4, fixed_abs, tag = 'smem constant byte address 0x4 - core index']
  #allocation1 [shape = 'u32[144,128]{1,0:T(1,128)}', space=vmem, size = 0x12000, scoped, tag = 'internal scratch']
  %s0 = inlined_call_operand.hbm [shape: bf16[8,32], index: 0, kind: input, shape index: {}]
  %s1 = inlined_call_operand.hbm [shape: bf16[8,32], index: 1, kind: input, shape index: {}]
  %s2 = inlined_call_operand.vmem [shape: f32[1,8], index: 2, kind: input, shape index: {}]
  %s3 = inlined_call_operand.hbm [shape: f32[8,8], index: 3, kind: output, shape index: {}]
  %s4 = sld [smem:[#allocation0]]
  $region38: #{tpu_custom_call.1} parent=0
    _
  %s6 = ssub.s32 1, %s4
  %s7 = scalar_select 0, %s6, %s4
  $region1: #{tpu_custom_call.1} parent=0
    #allocation2 [shape = 'u8[2048]{0}', space=vmem, size = 0x800, scoped, tag = 'input window, operand 0, single buffered']
    #allocation3 [shape = 's32[1]{0}', space=sflag, size = 0x4, scoped, tag = 'scoped memory for tpu_custom_call.1']
    #allocation4 [shape = 's32[1]{0}', space=sflag, size = 0x4, scoped, tag = 'scoped memory for tpu_custom_call.1']
    #allocation5 [shape = 'u8[2048]{0}', space=vmem, size = 0x800, scoped, tag = 'input window, operand 1, single buffered']
    #allocation6 [shape = 's32[1]{0}', space=sflag, size = 0x4, scoped, tag = 'scoped memory for tpu_custom_call.1']
    #allocation7 [shape = 'u8[4096]{0}', space=vmem, size = 0x1000, scoped, tag = 'output window, operand 0, single buffered']
    %8 = vsyncpa [#allocation3], 0
    %9 = vsyncpa [#allocation6], 0
    %10 = vsyncpa [#allocation4], 0
    // Predicated region
    $region2: #{tpu_custom_call.1} parent=1 // pred_check
      _
    $region3: #{tpu_custom_call.1} parent=1 // pred_check_branch
      %12 = sbr.rel (0) target = $region5
    $region4: #{tpu_custom_call.1} parent=1 // pred_region
      %s14 = ssub.s32 64, 64
      %15 = vsyncadd [#allocation3], %s14
      %s17 = sshll.u32 [#allocation2], 4
      %s18 = int_to_ptr.vmem [resolvable:$true] %s17
      %20 = dma.hbm_to_vmem [thread:$0]  %s0, 64, %s18, [#allocation3]
    $region5: #{tpu_custom_call.1} parent=1 // pred_fallthru
      _
    // Predicated region
    $region6: #{tpu_custom_call.1} parent=1 // pred_check
      _
    $region7: #{tpu_custom_call.1} parent=1 // pred_check_branch
      %22 = sbr.rel (0) target = $region9
    $region8: #{tpu_custom_call.1} parent=1 // pred_region
      %s24 = ssub.s32 64, 64
      %25 = vsyncadd [#allocation6], %s24
      %s27 = sshll.u32 [#allocation5], 4
      %s28 = int_to_ptr.vmem [resolvable:$true] %s27
      %30 = dma.hbm_to_vmem [thread:$0]  %s1, 64, %s28, [#allocation6]
    $region9: #{tpu_custom_call.1} parent=1 // pred_fallthru
      _
    // Predicated region
    $region10: #{tpu_custom_call.1} parent=1 // pred_check
      _
    $region11: #{tpu_custom_call.1} parent=1 // pred_check_branch
      %32 = sbr.rel (0) target = $region13
    $region12: #{tpu_custom_call.1} parent=1 // pred_region
      _
    $region13: #{tpu_custom_call.1} parent=1 // pred_fallthru
      _
    // Predicated region
    $region14: #{tpu_custom_call.1} parent=1 // pred_check
      _
    $region15: #{tpu_custom_call.1} parent=1 // pred_check_branch
      %34 = sbr.rel (0) target = $region17
    $region16: #{tpu_custom_call.1} parent=1 // pred_region
      %35 = dma.done [#allocation3], 64
    $region17: #{tpu_custom_call.1} parent=1 // pred_fallthru
      _
    // Predicated region
    $region18: #{tpu_custom_call.1} parent=1 // pred_check
      _
    $region19: #{tpu_custom_call.1} parent=1 // pred_check_branch
      %37 = sbr.rel (0) target = $region21
    $region20: #{tpu_custom_call.1} parent=1 // pred_region
      %38 = dma.done [#allocation6], 64
    $region21: #{tpu_custom_call.1} parent=1 // pred_fallthru
      _
    %v40 = vld [vmem:[#allocation2] sm:$0xf]
    %v41 = vld [vmem:[#allocation5] sm:$0xf]
    %vm42 = vcmask 261120
    %v44 = vsel %vm42, %v40, 0
    %v47 = vsel %vm42, %v41, 0
    %49 = vmatprep.subr.bf16.mxu0 0
    %50 = vmatpush1.bf16.xpose.msra.mxu0 %v47
    %51 = vmatprep.subr.bf16.mxu0 0
    %52 = vmatpush1.bf16.xpose.msra.mxu0 0
    %53 = vmatprep.subr.bf16.mxu0 0
    %54 = vmatpush1.bf16.xpose.msra.mxu0 0
    %55 = vmatprep.subr.bf16.mxu0 0
    %56 = vmatpush1.bf16.xpose.msra.mxu0 0
    %57 = vmatprep.subr.bf16.mxu0 0
    %58 = vmatpush1.bf16.xpose.msra.mxu0 0
    %59 = vmatprep.subr.bf16.mxu0 0
    %60 = vmatpush1.bf16.xpose.msra.mxu0 0
    %61 = vmatprep.subr.bf16.mxu0 0
    %62 = vmatpush1.bf16.xpose.msra.mxu0 0
    %63 = vmatprep.subr.bf16.mxu0 0
    %64 = vmatpush1.bf16.xpose.msra.mxu0 0
    %65 = vmatprep.subr.bf16.mxu0 0
    %66 = vmatpush1.bf16.xpose.msra.mxu0 0
    %67 = vmatprep.subr.bf16.mxu0 0
    %68 = vmatpush1.bf16.xpose.msra.mxu0 0
    %69 = vmatprep.subr.bf16.mxu0 0
    %70 = vmatpush1.bf16.xpose.msra.mxu0 0
    %71 = vmatprep.subr.bf16.mxu0 0
    %72 = vmatpush1.bf16.xpose.msra.mxu0 0
    %73 = vmatprep.subr.bf16.mxu0 0
    %74 = vmatpush1.bf16.xpose.msra.mxu0 0
    %75 = vmatprep.subr.bf16.mxu0 0
    %76 = vmatpush1.bf16.xpose.msra.mxu0 0
    %77 = vmatprep.subr.bf16.mxu0 0
    %78 = vmatpush1.bf16.xpose.msra.mxu0 0
    %79 = vmatprep.subr.bf16.mxu0 0
    %80 = vmatpush1.bf16.xpose.msra.mxu0 0
    %81 = vmatprep.mubr.bf16.mxu0 0
    %82 = vmatmul.mubr.bf16.gmra.mrb[0].mxu0 %v44
    %v83 = vpop.f32.mrb[0].mxu0
    %v84 = vadd.f32 0.0, %v83
    %v85 = vpop.f32.mrb[0].mxu0
    %v86 = vpop.f32.mrb[0].mxu0
    %v87 = vpop.f32.mrb[0].mxu0
    %88 = vdwg.mxu0
    %p89 = scmp.eq.s32.totalorder 0, 0
    // Predicated region
    $region22: #{tpu_custom_call.1} parent=1 // pred_check
      %p90 = pneg %p89
    $region23: #{tpu_custom_call.1} parent=1 // pred_check_branch
      %92 = sbr.rel (%p90) target = $region25
    $region24: #{tpu_custom_call.1} parent=1 // pred_region
      %v93 = vld [vmem:[%s2] sm:$0x1]
      %v95 = vlaneseq
      %v96 = vshrl.u32 %v95, 7
      %v97 = vsub.s32 0, %v96
      %v98 = vrot.slane %v93, %v97
      %v100 = vadd.f32 %v84, %v98
      %vm101 = vcmask 64512
      %102 = vst.msk [vmem:[#allocation7] sm:$0xff] %vm101, %v100
    $region25: #{tpu_custom_call.1} parent=1 // pred_fallthru
      _
    %p103 = scmp.ne.s32.totalorder 0, 0
    // Predicated region
    $region26: #{tpu_custom_call.1} parent=1 // pred_check
      %p104 = pneg %p103
    $region27: #{tpu_custom_call.1} parent=1 // pred_check_branch
      %106 = sbr.rel (%p104) target = $region29
    $region28: #{tpu_custom_call.1} parent=1 // pred_region
      %v107 = vld [vmem:[#allocation7] sm:$0xff]
      %v108 = vadd.f32 %v107, %v84
      %vm109 = vcmask 64512
      %110 = vst.msk [vmem:[#allocation7] sm:$0xff] %vm109, %v108
    $region29: #{tpu_custom_call.1} parent=1 // pred_fallthru
      _
    // Predicated region
    $region30: #{tpu_custom_call.1} parent=1 // pred_check
      _
    $region31: #{tpu_custom_call.1} parent=1 // pred_check_branch
      %112 = sbr.rel (0) target = $region33
    $region32: #{tpu_custom_call.1} parent=1 // pred_region
      %s114 = ssub.s32 128, 128
      %115 = vsyncadd [#allocation4], %s114
      %s117 = sshll.u32 [#allocation7], 4
      %s118 = int_to_ptr.vmem [resolvable:$true] %s117
      %120 = dma.vmem_to_hbm [thread:$0]  %s118, 128, %s3, [#allocation4]
    $region33: #{tpu_custom_call.1} parent=1 // pred_fallthru
      _
    // Predicated region
    $region34: #{tpu_custom_call.1} parent=1 // pred_check
      _
    $region35: #{tpu_custom_call.1} parent=1 // pred_check_branch
      %122 = sbr.rel (0) target = $region37
    $region36: #{tpu_custom_call.1} parent=1 // pred_region
      %123 = dma.done [#allocation4], 128
    $region37: #{tpu_custom_call.1} parent=1 // pred_fallthru
      _
    %124 = vsyncpa [#allocation3], 1
    %125 = vsyncpa [#allocation6], 1
    %126 = vsyncpa [#allocation4], 1

</llo_original>
